<compile_context>
chip_gen: v7x
topology: tpu7x:2x2x1
jax: 0.10.0
libtpu: 0.0.40
codegen_flags: <defaults>
</compile_context>

<pallas_src>
import jax
import jax.numpy as jnp
import numpy as np
from jax.experimental import pallas as pl
from jax.experimental.pallas import tpu as pltpu

OUT_W = 8            # padded class width: 2 real classes + 6 dead lanes
NEG_BIG = -1e30      # bias for padded class lanes -> exp() == 0.0


def _round_up(x, m):
    return ((x + m - 1) // m) * m


def fused_affine_softmax_kernel(x_ref, w_ref, b_ref, o_ref):
    # x_ref: [tb, F]  w_ref: [F, OUT_W]  b_ref: [1, OUT_W]  o_ref: [tb, OUT_W]
    logits = jnp.dot(x_ref[...], w_ref[...],
                     preferred_element_type=jnp.float32) + b_ref[...]
    # Numerically stable softmax over the (padded) class axis.  Padded lanes
    # carry the NEG_BIG bias, so exp(logit - m) is exactly 0 there and the
    # denominator only sums the 2 real classes.
    m = jnp.max(logits, axis=-1, keepdims=True)
    e = jnp.exp(logits - m)
    denom = jnp.sum(e, axis=-1, keepdims=True)
    o_ref[...] = (e / denom).astype(o_ref.dtype)


def fold_and_pad_params(params):
    """Fold fc1/fc2/fc3 into one affine map and pad the class dim to OUT_W.

    Exact because the module has no nonlinearity between the Linear layers.
    Done once per parameter update, outside the kernel.  Weights are stored
    transposed ([in, out]) so folding is plain chained matmul.
    """
    w = params["w1"] @ params["w2"] @ params["w3"]                                   # [10, 2]
    b = (params["b1"] @ params["w2"] + params["b2"]) @ params["w3"] + params["b3"]   # [1, 2]
    f_in, n_out = w.shape
    w_pad = jnp.zeros((f_in, OUT_W), jnp.float32).at[:, :n_out].set(w)
    b_pad = jnp.full((1, OUT_W), NEG_BIG, jnp.float32).at[:, :n_out].set(b)
    return {"w": w_pad, "b": b_pad, "n_out": int(n_out)}


def mlp_forward(x, folded, *, tile_b=2048):
    """x: [B, 10] float32.  folded: output of fold_and_pad_params.  Returns [B, 2]."""
    B, F = x.shape
    w_pad, b_pad, n_out = folded["w"], folded["b"], folded["n_out"]

    # Tile selection:
    #  * cap so the grid has >= 2 steps whenever B allows it (v7x has 2 TCs;
    #    a single grid step would leave one idle),
    #  * derive tb from the grid, not the grid from tb, so a batch slightly
    #    above tile_b does not round up to 2*tile_b of work,
    #  * no whole-array pad: the ragged last block is masked by Pallas
    #    (discarded tail rows may compute on garbage, which is harmless).
    tb = max(8, min(tile_b, _round_up(pl.cdiv(B, 2), 8)))
    grid_n = pl.cdiv(B, tb)
    tb = _round_up(pl.cdiv(B, grid_n), 8)
    grid_n = pl.cdiv(B, tb)

    out = pl.pallas_call(
        fused_affine_softmax_kernel,
        out_shape=jax.ShapeDtypeStruct((B, OUT_W), jnp.float32),
        grid=(grid_n,),
        in_specs=[
            pl.BlockSpec((tb, F), lambda i: (i, 0)),        # batch-tiled activations
            pl.BlockSpec((F, OUT_W), lambda i: (0, 0)),     # VMEM-resident folded weight
            pl.BlockSpec((1, OUT_W), lambda i: (0, 0)),     # VMEM-resident folded bias
        ],
        out_specs=pl.BlockSpec((tb, OUT_W), lambda i: (i, 0)),
        compiler_params=pltpu.CompilerParams(
            dimension_semantics=("parallel",)),
        cost_estimate=pl.CostEstimate(
            flops=2 * B * F * OUT_W,
            transcendentals=B * OUT_W,
            bytes_accessed=4 * (B * F + F * OUT_W + OUT_W + B * OUT_W)),
    )(x, w_pad, b_pad)

    # Narrow padded slab -> real [B, 2] probabilities (cheap: only 8 lanes wide).
    return out[:, :n_out]


def init_params(key):
    """Deterministic init mimicking PyTorch nn.Linear default
    (uniform in [-1/sqrt(fan_in), 1/sqrt(fan_in)]).  Weights stored transposed
    as [in, out]; biases as [1, out]."""
    def linear(k, fan_in, fan_out):
        kw, kb = jax.random.split(k)
        bound = 1.0 / np.sqrt(fan_in)
        w = jax.random.uniform(kw, (fan_in, fan_out), jnp.float32, -bound, bound)
        b = jax.random.uniform(kb, (1, fan_out), jnp.float32, -bound, bound)
        return w, b

    k1, k2, k3 = jax.random.split(key, 3)
    w1, b1 = linear(k1, 10, 20)
    w2, b2 = linear(k2, 20, 20)
    w3, b3 = linear(k3, 20, 2)
    return {"w1": w1, "b1": b1, "w2": w2, "b2": b2, "w3": w3, "b3": b3}


def reference_forward(x, params):
    # Unfused reference matching the PyTorch module exactly (3 Linears + softmax).
    h1 = x @ params["w1"] + params["b1"]
    h2 = h1 @ params["w2"] + params["b2"]
    logits = h2 @ params["w3"] + params["b3"]
    return jax.nn.softmax(logits, axis=1)


if __name__ == "__main__":
    key = jax.random.PRNGKey(0)
    k_x, k_p, k_x2 = jax.random.split(key, 3)

    params = init_params(k_p)
    folded = fold_and_pad_params(params)

    # Case 1: small, evenly-tiling batch (also exercises the 2-step grid path).
    B = 64
    x = jax.random.normal(k_x, (B, 10), jnp.float32)
    out = jax.block_until_ready(mlp_forward(x, folded))
    ref = reference_forward(x, params)
    np.testing.assert_allclose(np.asarray(out), np.asarray(ref),
                               rtol=1e-3, atol=1e-3)
    assert out.shape == (B, 2)

    # Case 2: ragged batch (last block partially masked, no jnp.pad of x).
    B2 = 37
    x2 = jax.random.normal(k_x2, (B2, 10), jnp.float32)
    out2 = jax.block_until_ready(mlp_forward(x2, folded))
    ref2 = reference_forward(x2, params)
    np.testing.assert_allclose(np.asarray(out2), np.asarray(ref2),
                               rtol=1e-3, atol=1e-3)
    assert out2.shape == (B2, 2)

    print("KERNEL_OK")
</pallas_src>

<mosaic_0001>
module attributes {stable_mosaic.version = 11 : i64} {
  func.func @fused_affine_softmax_kernel(%arg0: i32, %arg1: memref<32x10xf32, #tpu.memory_space<vmem>>, %arg2: memref<10x8xf32, #tpu.memory_space<vmem>>, %arg3: memref<1x8xf32, #tpu.memory_space<vmem>>, %arg4: memref<32x8xf32, #tpu.memory_space<vmem>>) attributes {dimension_semantics = [#tpu.dimension_semantics<parallel>], iteration_bounds = array<i64: 2>, scalar_prefetch = 0 : i64, scratch_operands = 0 : i64, tpu.core_type = #tpu.core_type<tc>, window_params = [{transform_indices = @transform_0, window_bounds = array<i64: 32, 10>}, {pipeline_mode = #tpu.pipeline_mode<synchronous>, transform_indices = @transform_1, window_bounds = array<i64: 10, 8>}, {pipeline_mode = #tpu.pipeline_mode<synchronous>, transform_indices = @transform_2, window_bounds = array<i64: 1, 8>}, {transform_indices = @transform_3, window_bounds = array<i64: 32, 8>}]} {
    %c0 = arith.constant 0 : index
    %c0_0 = arith.constant 0 : index
    %0 = vector.load %arg1[%c0, %c0_0] : memref<32x10xf32, #tpu.memory_space<vmem>>, vector<32x10xf32>
    %c0_1 = arith.constant 0 : index
    %c0_2 = arith.constant 0 : index
    %1 = vector.load %arg2[%c0_1, %c0_2] : memref<10x8xf32, #tpu.memory_space<vmem>>, vector<10x8xf32>
    %cst = arith.constant dense<0.000000e+00> : vector<32x8xf32>
    %2 = tpu.matmul %0, %1, %cst {dimension_numbers = #tpu.dot_dimension_numbers<[1], [0], [0], [1], [0, 0, 1, 1], [], []>} : vector<32x10xf32>, vector<10x8xf32>, vector<32x8xf32> -> vector<32x8xf32>
    %c0_3 = arith.constant 0 : index
    %c0_4 = arith.constant 0 : index
    %3 = vector.load %arg3[%c0_3, %c0_4] : memref<1x8xf32, #tpu.memory_space<vmem>>, vector<1x8xf32>
    %4 = vector.broadcast %3 : vector<1x8xf32> to vector<32x8xf32>
    %5 = arith.addf %2, %4 : vector<32x8xf32>
    %cst_5 = arith.constant dense<0xFF800000> : vector<32xf32>
    %6 = vector.multi_reduction <maximumf>, %5, %cst_5 [1] : vector<32x8xf32> to vector<32xf32>
    %7 = vector.shape_cast %6 : vector<32xf32> to vector<32x1xf32>
    %8 = vector.broadcast %7 : vector<32x1xf32> to vector<32x8xf32>
    %9 = arith.subf %5, %8 : vector<32x8xf32>
    %10 = math.exp %9 : vector<32x8xf32>
    %cst_6 = arith.constant dense<0.000000e+00> : vector<32xf32>
    %11 = vector.multi_reduction <add>, %10, %cst_6 [1] : vector<32x8xf32> to vector<32xf32>
    %12 = vector.shape_cast %11 : vector<32xf32> to vector<32x1xf32>
    %13 = vector.broadcast %12 : vector<32x1xf32> to vector<32x8xf32>
    %14 = arith.divf %10, %13 : vector<32x8xf32>
    %c0_7 = arith.constant 0 : index
    %c0_8 = arith.constant 0 : index
    %15 = vector.load %arg4[%c0_7, %c0_8] : memref<32x8xf32, #tpu.memory_space<vmem>>, vector<32x8xf32>
    tpu.vector_store %arg4[%c0_7, %c0_8], %14 {strides = array<i32>} : memref<32x8xf32, #tpu.memory_space<vmem>>, vector<32x8xf32>,
    return
  }
  func.func @transform_0(%arg0: i32) -> (i32, i32) {
    %c0_i32 = arith.constant 0 : i32
    %c0_i32_0 = arith.constant 0 : i32
    return %arg0, %c0_i32 : i32, i32
  }
  func.func @transform_1(%arg0: i32) -> (i32, i32) {
    %c0_i32 = arith.constant 0 : i32
    %c0_i32_0 = arith.constant 0 : i32
    %c0_i32_1 = arith.constant 0 : i32
    return %c0_i32, %c0_i32_0 : i32, i32
  }
  func.func @transform_2(%arg0: i32) -> (i32, i32) {
    %c0_i32 = arith.constant 0 : i32
    %c0_i32_0 = arith.constant 0 : i32
    %c0_i32_1 = arith.constant 0 : i32
    return %c0_i32, %c0_i32_0 : i32, i32
  }
  func.func @transform_3(%arg0: i32) -> (i32, i32) {
    %c0_i32 = arith.constant 0 : i32
    %c0_i32_0 = arith.constant 0 : i32
    return %arg0, %c0_i32 : i32, i32
  }
}

</mosaic_0001>

<llo_original>
// kernel: tpu_custom_call.1
$region0: #{tpu_custom_call.1}
  #allocation0 [shape = 'u32[]', space=smem, size = 0x4, offset = 0x4, fixed_abs, tag = 'smem constant byte address 0x4 - core index']
  #allocation1 [shape = 'u32[144,128]{1,0:T(1,128)}', space=vmem, size = 0x12000, scoped, tag = 'internal scratch']
  %s0 = inlined_call_operand.vmem [shape: f32[64,10], index: 0, kind: input, shape index: {}]
  %s1 = inlined_call_operand.vmem [shape: f32[10,8], index: 1, kind: input, shape index: {}]
  %s2 = inlined_call_operand.vmem [shape: f32[1,8], index: 2, kind: input, shape index: {}]
  %s3 = inlined_call_operand.vmem [shape: f32[64,8], index: 3, kind: output, shape index: {}]
  %s4 = sld [smem:[#allocation0]]
  $region45: #{tpu_custom_call.1} parent=0
    _
  %s6 = ssub.s32 1, %s4
  %s7 = scalar_select 0, %s6, %s4
  loop: start=0, step=1, limit=4
  $region2: #{tpu_custom_call.1} parent=0 // loop_pre_header
    _
  $region3: #{tpu_custom_call.1} parent=0 // loop_header
    %s9 = sphi 0, %s13
    %p10 = scmp.ge.s32.totalorder %s9, 4
    %s19 = sphi 0, %s21
    %s22 = sphi 0, %s19
    %s23 = sphi 0, %s22
    %s39 = sphi 0, %s23
    %s43 = sphi 0, %s43
    %s45 = sphi 0, %s43
    %s46 = sphi 0, %s45
    %s60 = sphi 0, %s46
    %s64 = sphi 0, %s64
    %s66 = sphi 0, %s64
    %s67 = sphi 0, %s66
    %s81 = sphi 0, %s67
    %s87 = sphi 0, %s89
    %s90 = sphi 0, %s87
    %s91 = sphi 0, %s90
    %s107 = sphi 0, %s91
  $region4: #{tpu_custom_call.1} parent=0 // loop_header_branch
    %12 = sbr.rel (%p10) target = $region8
  $region5: #{tpu_custom_call.1} parent=0 // loop_body
    %s14 = ssub.s32 %s9, 1
    %s15 = ssub.s32 %s9, 2
    %s16 = sadd.s32 %s9, 1
    %s17 = ssub.s32 %s9, %s16
    %p18 = scmp.eq.s32.totalorder %s17, 0
    %s20 = sadd.s32 %s19, 1
    %s21 = scalar_select %p18, %s19, %s20
    %p24 = pneg %p18
    %p25 = scmp.eq.s32.totalorder %s9, 1
    %p26 = por %p24, %p25
    %p27 = scmp.ne.s32.totalorder %s19, %s22
    %p28 = scmp.eq.s32.totalorder %s9, 0
    %p29 = por %p27, %p28
    %p30 = scmp.ne.s32.totalorder %s19, %s22
    %p31 = scmp.eq.s32.totalorder %s14, 1
    %p32 = por %p30, %p31
    %p33 = scmp.ne.s32.totalorder %s22, %s23
    %p34 = scmp.eq.s32.totalorder %s14, 0
    %p35 = por %p33, %p34
    %p36 = scmp.ne.s32.totalorder %s22, %s23
    %p37 = scmp.eq.s32.totalorder %s15, 1
    %p38 = por %p36, %p37
    %p40 = scmp.ne.s32.totalorder %s23, %s39
    %p41 = scmp.eq.s32.totalorder %s15, 0
    %p42 = por %p40, %p41
    %s44 = sadd.s32 %s43, 1
    %p47 = scmp.eq.s32.totalorder %s9, 1
    %p48 = scmp.ne.s32.totalorder %s43, %s45
    %p49 = scmp.eq.s32.totalorder %s9, 0
    %p50 = por %p48, %p49
    %p51 = scmp.ne.s32.totalorder %s43, %s45
    %p52 = scmp.eq.s32.totalorder %s14, 1
    %p53 = por %p51, %p52
    %p54 = scmp.ne.s32.totalorder %s45, %s46
    %p55 = scmp.eq.s32.totalorder %s14, 0
    %p56 = por %p54, %p55
    %p57 = scmp.ne.s32.totalorder %s45, %s46
    %p58 = scmp.eq.s32.totalorder %s15, 1
    %p59 = por %p57, %p58
    %p61 = scmp.ne.s32.totalorder %s46, %s60
    %p62 = scmp.eq.s32.totalorder %s15, 0
    %p63 = por %p61, %p62
    %s65 = sadd.s32 %s64, 1
    %p68 = scmp.eq.s32.totalorder %s9, 1
    %p69 = scmp.ne.s32.totalorder %s64, %s66
    %p70 = scmp.eq.s32.totalorder %s9, 0
    %p71 = por %p69, %p70
    %p72 = scmp.ne.s32.totalorder %s64, %s66
    %p73 = scmp.eq.s32.totalorder %s14, 1
    %p74 = por %p72, %p73
    %p75 = scmp.ne.s32.totalorder %s66, %s67
    %p76 = scmp.eq.s32.totalorder %s14, 0
    %p77 = por %p75, %p76
    %p78 = scmp.ne.s32.totalorder %s66, %s67
    %p79 = scmp.eq.s32.totalorder %s15, 1
    %p80 = por %p78, %p79
    %p82 = scmp.ne.s32.totalorder %s67, %s81
    %p83 = scmp.eq.s32.totalorder %s15, 0
    %p84 = por %p82, %p83
    %s85 = ssub.s32 %s9, %s16
    %p86 = scmp.eq.s32.totalorder %s85, 0
    %s88 = sadd.s32 %s87, 1
    %s89 = scalar_select %p86, %s87, %s88
    %p92 = pneg %p86
    %p93 = scmp.eq.s32.totalorder %s9, 1
    %p94 = por %p92, %p93
    %p95 = scmp.ne.s32.totalorder %s87, %s90
    %p96 = scmp.eq.s32.totalorder %s9, 0
    %p97 = por %p95, %p96
    %p98 = scmp.ne.s32.totalorder %s87, %s90
    %p99 = scmp.eq.s32.totalorder %s14, 1
    %p100 = por %p98, %p99
    %p101 = scmp.ne.s32.totalorder %s90, %s91
    %p102 = scmp.eq.s32.totalorder %s14, 0
    %p103 = por %p101, %p102
    %p104 = scmp.ne.s32.totalorder %s90, %s91
    %p105 = scmp.eq.s32.totalorder %s15, 1
    %p106 = por %p104, %p105
    %p108 = scmp.ne.s32.totalorder %s91, %s107
    %p109 = scmp.eq.s32.totalorder %s15, 0
    %p110 = por %p108, %p109
    %p111 = scmp.le.s32.totalorder 1, %s9
    %p112 = scmp.lt.s32.totalorder %s9, 3
    %p113 = pnand %p111, %p112
    %p114 = pneg %p113
    // Predicated region
    $region9: #{tpu_custom_call.1} parent=5 // pred_check
      _
    $region10: #{tpu_custom_call.1} parent=5 // pred_check_branch
      %116 = sbr.rel (%p113) target = $region12
    $region11: #{tpu_custom_call.1} parent=5 // pred_region
      %s117 = ssub.s32 %s9, 1
      // Predicated region
      $region13: #{tpu_custom_call.1} parent=11 // pred_check
        %p118 = pneg %p56
      $region14: #{tpu_custom_call.1} parent=11 // pred_check_branch
        %120 = sbr.rel (%p118) target = $region16
      $region15: #{tpu_custom_call.1} parent=11 // pred_region
        _
      $region16: #{tpu_custom_call.1} parent=11 // pred_fallthru
        _
      // Predicated region
      $region17: #{tpu_custom_call.1} parent=11 // pred_check
        %p121 = pneg %p77
      $region18: #{tpu_custom_call.1} parent=11 // pred_check_branch
        %123 = sbr.rel (%p121) target = $region20
      $region19: #{tpu_custom_call.1} parent=11 // pred_region
        _
      $region20: #{tpu_custom_call.1} parent=11 // pred_fallthru
        _
    $region12: #{tpu_custom_call.1} parent=5 // pred_fallthru
      _
    %p124 = scmp.lt.s32.totalorder %s9, 2
    // Predicated region
    $region21: #{tpu_custom_call.1} parent=5 // pred_check
      %p125 = pneg %p124
    $region22: #{tpu_custom_call.1} parent=5 // pred_check_branch
      %127 = sbr.rel (%p125) target = $region24
    $region23: #{tpu_custom_call.1} parent=5 // pred_region
      // Predicated region
      $region25: #{tpu_custom_call.1} parent=23 // pred_check
        %p128 = pneg %p29
      $region26: #{tpu_custom_call.1} parent=23 // pred_check_branch
        %130 = sbr.rel (%p128) target = $region28
      $region27: #{tpu_custom_call.1} parent=23 // pred_region
        %s131 = smul.u32 4, %s9
        %p132 = scmp.lt.s32.totalorder %s131, 7
        %s133 = scalar_select %p132, %s131, 7
        %s134 = smul.addr %s133, 8
        %s135 = scalar_lea.vmem %s0, %s134
        %s136 = smul.u32 4, %s9
      $region28: #{tpu_custom_call.1} parent=23 // pred_fallthru
        _
    $region24: #{tpu_custom_call.1} parent=5 // pred_fallthru
      _
    %p137 = scmp.le.s32.totalorder 1, %s9
    %p138 = scmp.lt.s32.totalorder %s9, 3
    %p139 = pnand %p137, %p138
    %p140 = pneg %p139
    // Predicated region
    $region29: #{tpu_custom_call.1} parent=5 // pred_check
      _
    $region30: #{tpu_custom_call.1} parent=5 // pred_check_branch
      %142 = sbr.rel (%p139) target = $region32
    $region31: #{tpu_custom_call.1} parent=5 // pred_region
      %s143 = ssub.s32 %s9, 1
      %s144 = smul.u32 4, %s14
      %p145 = scmp.lt.s32.totalorder %s144, 7
      %s146 = scalar_select %p145, %s144, 7
      %s147 = smul.addr %s146, 8
      %s148 = scalar_lea.vmem %s0, %s147
      %p149 = pneg %p35
      %p150 = pneg %p32
      %p151 = pneg %p56
      %p152 = pneg %p53
      %p153 = pneg %p77
      %p154 = pneg %p74
      %p155 = pneg %p103
      %p156 = pneg %p100
      %s157 = smul.u32 4, %s14
      %p158 = scmp.lt.s32.totalorder %s157, 7
      %s159 = scalar_select %p158, %s157, 7
      %s160 = smul.addr %s159, 8
      %s161 = scalar_lea.vmem %s3, %s160
      %s162 = smul.u32 4, %s14
      %p163 = scmp.lt.s32.totalorder %s162, 7
      %s164 = scalar_select %p163, %s162, 7
      %s165 = smul.addr %s164, 8
      %s166 = scalar_lea.vmem %s0, %s165
      %s167 = smul.u32 4, %s14
      %s168 = smul.u32 4, %s14
      %p169 = scmp.lt.s32.totalorder %s168, 7
      %s170 = scalar_select %p169, %s168, 7
      %s171 = smul.addr %s170, 8
      %s172 = scalar_lea.vmem %s3, %s171
      %s173 = smul.u32 4, %s14
      %v174 = vld [vmem:[%s166] sm:$0xff]
      %v175 = vld [vmem:[%s166 + $0x8] sm:$0xff]
      %v176 = vld [vmem:[%s166 + $0x10] sm:$0xff]
      %v177 = vld [vmem:[%s166 + $0x18] sm:$0xff]
      %v178 = vld [vmem:[%s1] sm:$0xff]
      %v179 = vld [vmem:[%s1 + $0x8] sm:$0x3]
      %v180 = vld [vmem:[%s2] sm:$0x1]
      %v182 = vlaneseq
      %v183 = vshrl.u32 %v182, 7
      %v184 = vsub.s32 0, %v183
      %v185 = vrot.slane %v180, %v184
      %vm187 = vcmask 80896
      %v189 = vsel %vm187, %v174, 0
      %v192 = vsel %vm187, %v175, 0
      %v195 = vsel %vm187, %v176, 0
      %v198 = vsel %vm187, %v177, 0
      %vm200 = vcmask 1041408
      %v202 = vsel %vm200, %v179, 0
      %204 = vmatprep.subr.mxu0 0.0
      %205 = vmatpush1.msra.mxu0 %v178
      %206 = vmatprep.subr.mxu0 0.0
      %207 = vmatpush1.msra.mxu0 %v202
      %208 = vmatprep.subr.mxu0 0.0
      %209 = vmatpush1.msra.mxu0 0.0
      %210 = vmatprep.subr.mxu0 0.0
      %211 = vmatpush1.msra.mxu0 0.0
      %212 = vmatprep.subr.mxu0 0.0
      %213 = vmatpush1.msra.mxu0 0.0
      %214 = vmatprep.subr.mxu0 0.0
      %215 = vmatpush1.msra.mxu0 0.0
      %216 = vmatprep.subr.mxu0 0.0
      %217 = vmatpush1.msra.mxu0 0.0
      %218 = vmatprep.subr.mxu0 0.0
      %219 = vmatpush1.msra.mxu0 0.0
      %220 = vmatprep.subr.mxu0 0.0
      %221 = vmatpush1.msra.mxu0 0.0
      %222 = vmatprep.subr.mxu0 0.0
      %223 = vmatpush1.msra.mxu0 0.0
      %224 = vmatprep.subr.mxu0 0.0
      %225 = vmatpush1.msra.mxu0 0.0
      %226 = vmatprep.subr.mxu0 0.0
      %227 = vmatpush1.msra.mxu0 0.0
      %228 = vmatprep.subr.mxu0 0.0
      %229 = vmatpush1.msra.mxu0 0.0
      %230 = vmatprep.subr.mxu0 0.0
      %231 = vmatpush1.msra.mxu0 0.0
      %232 = vmatprep.subr.mxu0 0.0
      %233 = vmatpush1.msra.mxu0 0.0
      %234 = vmatprep.subr.mxu0 0.0
      %235 = vmatpush1.msra.mxu0 0.0
      %236 = vmatprep.subr.mxu0 0.0
      %237 = vmatpush1.msra.mxu0 0.0
      %238 = vmatprep.subr.mxu0 0.0
      %239 = vmatpush1.msra.mxu0 0.0
      %240 = vmatprep.subr.mxu0 0.0
      %241 = vmatpush1.msra.mxu0 0.0
      %242 = vmatprep.subr.mxu0 0.0
      %243 = vmatpush1.msra.mxu0 0.0
      %244 = vmatprep.subr.mxu0 0.0
      %245 = vmatpush1.msra.mxu0 0.0
      %246 = vmatprep.subr.mxu0 0.0
      %247 = vmatpush1.msra.mxu0 0.0
      %248 = vmatprep.subr.mxu0 0.0
      %249 = vmatpush1.msra.mxu0 0.0
      %250 = vmatprep.subr.mxu0 0.0
      %251 = vmatpush1.msra.mxu0 0.0
      %252 = vmatprep.subr.mxu0 0.0
      %253 = vmatpush1.msra.mxu0 0.0
      %254 = vmatprep.subr.mxu0 0.0
      %255 = vmatpush1.msra.mxu0 0.0
      %256 = vmatprep.subr.mxu0 0.0
      %257 = vmatpush1.msra.mxu0 0.0
      %258 = vmatprep.subr.mxu0 0.0
      %259 = vmatpush1.msra.mxu0 0.0
      %260 = vmatprep.subr.mxu0 0.0
      %261 = vmatpush1.msra.mxu0 0.0
      %262 = vmatprep.subr.mxu0 0.0
      %263 = vmatpush1.msra.mxu0 0.0
      %264 = vmatprep.subr.mxu0 0.0
      %265 = vmatpush1.msra.mxu0 0.0
      %266 = vmatprep.subr.mxu0 0.0
      %267 = vmatpush1.msra.mxu0 0.0
      %268 = vmatprep.mubr.f32.mxu0 0.0
      %269 = vmatmul.mubr.f32.gmra.mrb[0].mxu0 %v189
      %v270 = vpop.f32.mrb[0].mxu0
      %v271 = vadd.f32 %v185, %v270
      %v272 = vpop.f32.mrb[0].mxu0
      %273 = vmatprep.mubr.f32.mxu0 0.0
      %274 = vmatmul.mubr.f32.gmra.mrb[0].mxu0 %v192
      %v275 = vpop.f32.mrb[0].mxu0
      %v276 = vadd.f32 %v185, %v275
      %v277 = vpop.f32.mrb[0].mxu0
      %278 = vmatprep.mubr.f32.mxu0 0.0
      %279 = vmatmul.mubr.f32.gmra.mrb[0].mxu0 %v195
      %v280 = vpop.f32.mrb[0].mxu0
      %v281 = vadd.f32 %v185, %v280
      %v282 = vpop.f32.mrb[0].mxu0
      %283 = vmatprep.mubr.f32.mxu0 0.0
      %284 = vmatmul.mubr.f32.gmra.mrb[0].mxu0 %v198
      %v285 = vpop.f32.mrb[0].mxu0
      %v286 = vadd.f32 %v185, %v285
      %v287 = vpop.f32.mrb[0].mxu0
      %288 = vdwg.mxu0
      %vm289 = vcmask 64512
      %v290 = vsel %vm289, %v271, -inf
      %291 = vmax.xlane.f32.xlu0 %v290
      %v292 = vpop.xlane.xlu0 %291
      %v293 = vsel %vm289, %v276, -inf
      %294 = vmax.xlane.f32.xlu0 %v293
      %v295 = vpop.xlane.xlu0 %294
      %v296 = vsel %vm289, %v281, -inf
      %297 = vmax.xlane.f32.xlu0 %v296
      %v298 = vpop.xlane.xlu0 %297
      %v299 = vsel %vm289, %v286, -inf
      %300 = vmax.xlane.f32.xlu0 %v299
      %v301 = vpop.xlane.xlu0 %300
      %v302 = vsub.f32 %v271, %v292
      %v303 = vsub.f32 %v276, %v295
      %v304 = vsub.f32 %v281, %v298
      %v305 = vsub.f32 %v286, %v301
      %v306 = vmul.f32 %v302, 1.442695
      %v307 = vpow.pop %v306
      %v308 = vmul.f32 %v303, 1.442695
      %v309 = vpow.pop %v308
      %v310 = vmul.f32 %v304, 1.442695
      %v311 = vpow.pop %v310
      %v312 = vmul.f32 %v305, 1.442695
      %v313 = vpow.pop %v312
      %v314 = vsel %vm289, %v307, 0.0
      %315 = vadd.xlane.f32.xlu0 %v314
      %v316 = vpop.xlane.xlu0 %315
      %v317 = vsel %vm289, %v309, 0.0
      %318 = vadd.xlane.f32.xlu0 %v317
      %v319 = vpop.xlane.xlu0 %318
      %v320 = vsel %vm289, %v311, 0.0
      %321 = vadd.xlane.f32.xlu0 %v320
      %v322 = vpop.xlane.xlu0 %321
      %v323 = vsel %vm289, %v313, 0.0
      %324 = vadd.xlane.f32.xlu0 %v323
      %v325 = vpop.xlane.xlu0 %324
      %v326 = vrcp.pop %v316
      %v327 = vmul.f32 %v307, %v326
      %v328 = vrcp.pop %v319
      %v329 = vmul.f32 %v309, %v328
      %v330 = vrcp.pop %v322
      %v331 = vmul.f32 %v311, %v330
      %v332 = vrcp.pop %v325
      %v333 = vmul.f32 %v313, %v332
      %334 = vst.msk [vmem:[%s172] sm:$0xff] %vm289, %v327
      %335 = vst.msk [vmem:[%s172 + $0x8] sm:$0xff] %vm289, %v329
      %336 = vst.msk [vmem:[%s172 + $0x10] sm:$0xff] %vm289, %v331
      %337 = vst.msk [vmem:[%s172 + $0x18] sm:$0xff] %vm289, %v333
      %s338 = smul.u32 4, %s14
      %p339 = scmp.lt.s32.totalorder %s338, 7
      %s340 = scalar_select %p339, %s338, 7
      %s341 = smul.addr %s340, 8
      %s342 = scalar_lea.vmem %s3, %s341
      // Predicated region
      $region33: #{tpu_custom_call.1} parent=31 // pred_check
        %p343 = pneg %p100
      $region34: #{tpu_custom_call.1} parent=31 // pred_check_branch
        %345 = sbr.rel (%p343) target = $region36
      $region35: #{tpu_custom_call.1} parent=31 // pred_region
        %s346 = smul.u32 4, %s14
      $region36: #{tpu_custom_call.1} parent=31 // pred_fallthru
        _
    $region32: #{tpu_custom_call.1} parent=5 // pred_fallthru
      _
    %p347 = scmp.le.s32.totalorder 2, %s9
    // Predicated region
    $region37: #{tpu_custom_call.1} parent=5 // pred_check
      %p348 = pneg %p347
    $region38: #{tpu_custom_call.1} parent=5 // pred_check_branch
      %350 = sbr.rel (%p348) target = $region40
    $region39: #{tpu_custom_call.1} parent=5 // pred_region
      %s351 = ssub.s32 %s9, 2
      // Predicated region
      $region41: #{tpu_custom_call.1} parent=39 // pred_check
        %p352 = pneg %p106
      $region42: #{tpu_custom_call.1} parent=39 // pred_check_branch
        %354 = sbr.rel (%p352) target = $region44
      $region43: #{tpu_custom_call.1} parent=39 // pred_region
        %s355 = smul.u32 4, %s15
        %p356 = scmp.lt.s32.totalorder %s355, 7
        %s357 = scalar_select %p356, %s355, 7
        %s358 = smul.addr %s357, 8
        %s359 = scalar_lea.vmem %s3, %s358
      $region44: #{tpu_custom_call.1} parent=39 // pred_fallthru
        _
    $region40: #{tpu_custom_call.1} parent=5 // pred_fallthru
      _
  $region6: #{tpu_custom_call.1} parent=0 // loop_footer
    %s13 = sadd.s32 1, %s9
  $region7: #{tpu_custom_call.1} parent=0 // loop_footer_branch
    %8 = sbr.rel target = $region3
  $region8: #{tpu_custom_call.1} parent=0 // loop_exit
    _

</llo_original>
